<compile_context>
chip_gen: v6e
topology: v6e:2x2x1
jax: 0.10.0
libtpu: 0.0.40
codegen_flags: <defaults>
</compile_context>

<pallas_src>
import jax
import jax.numpy as jnp
from jax.experimental import pallas as pl
from jax.experimental.pallas import tpu as pltpu

# Module hyperparameters (from the PyTorch source)
INPUT_SIZE = 784
HIDDEN_SIZE = 128
OUTPUT_SIZE = 10
DERIVATIVE_ORDER = 0.5          # statically 0.5 -> sqrt in-kernel
H_EPS = 1e-5

# Keeps double-buffered f32 x under v5e's 16 MiB default scoped-VMEM budget.
TILE_B_MAX = 1024


def _round_up(n, m):
    return ((n + m - 1) // m) * m


def _choose_tiling(batch):
    """Pick (tile_b, n_tiles) so padding stays < 8 * n_tiles rows and, when
    the batch allows it, the grid has >= 2 steps (v7x megacore)."""
    n_tiles = max(1, pl.cdiv(batch, TILE_B_MAX))
    if batch > 8:
        n_tiles = max(n_tiles, 2)
    tile_b = _round_up(pl.cdiv(batch, n_tiles), 8)
    return tile_b, n_tiles


def simple_network_kernel(x_ref, w1_ref, b1_ref, w2_ref, b2_ref, o_ref):
    # fc1: f32 MXU matmul with f32 accumulation.  f32 operands keep the
    # eps-wide activation kink exact (bf16 operands flip it); the kernel is
    # DMA-bound so the f32 MXU cost is hidden.
    h = jnp.dot(x_ref[...], w1_ref[...], preferred_element_type=jnp.float32)
    h = h + b1_ref[...]

    # FractionalActivation(relu, order=0.5):
    #   relu(h+eps) - relu(h) == clip(h+eps, 0, eps)   (exact closed form)
    base = jnp.maximum(h, 0.0)
    frac = jnp.sqrt(jnp.clip(h + H_EPS, 0.0, H_EPS) * (1.0 / H_EPS))
    a = base + frac

    # fc2: narrow-N matmul; Mosaic lane-pads to 128 in VMEM for free.
    y = jnp.dot(a, w2_ref[...], preferred_element_type=jnp.float32)
    o_ref[...] = (y + b2_ref[...]).astype(o_ref.dtype)


@jax.jit
def simple_network(x, w1, b1_2d, w2, b2_2d):
    """x: (B, 784) f32.  w1: (784, 128), b1_2d: (1, 128), w2: (128, 10),
    b2_2d: (1, 10) -- produced once by prepare_params (weights stored
    pre-transposed vs. PyTorch nn.Linear's (out, in) layout)."""
    batch = x.shape[0]
    tile_b, n_tiles = _choose_tiling(batch)
    bp = tile_b * n_tiles
    if bp != batch:                      # < 8*n_tiles rows; most shapes skip this
        x = jnp.pad(x, ((0, bp - batch), (0, 0)))

    out = pl.pallas_call(
        simple_network_kernel,
        out_shape=jax.ShapeDtypeStruct((bp, OUTPUT_SIZE), jnp.float32),
        grid=(n_tiles,),
        in_specs=[
            # x streamed per grid step (784 == full minor dim, so legal as-is)
            pl.BlockSpec((tile_b, INPUT_SIZE), lambda i: (i, 0)),
            # weights / biases: constant index_map -> VMEM-resident across steps
            pl.BlockSpec((INPUT_SIZE, HIDDEN_SIZE), lambda i: (0, 0)),
            pl.BlockSpec((1, HIDDEN_SIZE), lambda i: (0, 0)),
            pl.BlockSpec((HIDDEN_SIZE, OUTPUT_SIZE), lambda i: (0, 0)),
            pl.BlockSpec((1, OUTPUT_SIZE), lambda i: (0, 0)),
        ],
        # unpadded (tile_b, 10) output: full minor dim -> one contiguous DMA
        out_specs=pl.BlockSpec((tile_b, OUTPUT_SIZE), lambda i: (i, 0)),
        compiler_params=pltpu.CompilerParams(
            dimension_semantics=("parallel",)),   # megacore sharding on v7x
    )(x, w1, b1_2d, w2, b2_2d)

    return out[:batch] if bp != batch else out


def prepare_params(w1, b1, w2, b2):
    """One-time parameter prep, hoisted out of the per-call jitted path."""
    return (jnp.asarray(w1, jnp.float32),
            jnp.asarray(b1, jnp.float32).reshape(1, HIDDEN_SIZE),
            jnp.asarray(w2, jnp.float32),
            jnp.asarray(b2, jnp.float32).reshape(1, OUTPUT_SIZE))


def init_params(key):
    """Deterministic synthetic parameter init (no checkpoint load)."""
    k1, k2, k3, k4 = jax.random.split(key, 4)
    w1 = jax.random.normal(k1, (INPUT_SIZE, HIDDEN_SIZE), jnp.float32) * 0.02
    b1 = jax.random.normal(k2, (HIDDEN_SIZE,), jnp.float32) * 0.02
    w2 = jax.random.normal(k3, (HIDDEN_SIZE, OUTPUT_SIZE), jnp.float32) * 0.02
    b2 = jax.random.normal(k4, (OUTPUT_SIZE,), jnp.float32) * 0.02
    return w1, b1, w2, b2


def reference(x, w1, b1, w2, b2):
    """Pure-JAX f32 reference with the original finite-difference formulation."""
    hp = jax.lax.Precision.HIGHEST
    h = jnp.dot(x, w1, precision=hp) + b1.reshape(1, -1)
    base = jnp.maximum(h, 0.0)
    base_plus_h = jnp.maximum(h + H_EPS, 0.0)
    frac = ((base_plus_h - base) / H_EPS) ** DERIVATIVE_ORDER
    a = base + frac
    return jnp.dot(a, w2, precision=hp) + b2.reshape(1, -1)


if __name__ == "__main__":
    key = jax.random.PRNGKey(0)
    kx, kp = jax.random.split(key)
    batch = 64
    x = jax.random.normal(kx, (batch, INPUT_SIZE), jnp.float32)
    w1, b1, w2, b2 = init_params(kp)

    params = prepare_params(w1, b1, w2, b2)          # one-time, outside the jit
    out = simple_network(x, *params)
    out = jax.block_until_ready(out)

    ref = reference(x, w1, b1, w2, b2)
    assert out.shape == (batch, OUTPUT_SIZE), out.shape
    # Residual error is dominated by the f32 finite-difference noise in the
    # reference formulation (~3e-3 per hidden unit); the kernel's closed form
    # is exact.  2e-2 leaves ample margin.
    assert jnp.allclose(out, ref, atol=2e-2, rtol=2e-2), "mismatch vs reference"
    print("KERNEL_OK")
</pallas_src>

<mosaic_0001>
module attributes {stable_mosaic.version = 11 : i64} {
  func.func @simple_network_kernel(%arg0: i32, %arg1: memref<32x784xf32, #tpu.memory_space<vmem>>, %arg2: memref<784x128xf32, #tpu.memory_space<vmem>>, %arg3: memref<1x128xf32, #tpu.memory_space<vmem>>, %arg4: memref<128x10xf32, #tpu.memory_space<vmem>>, %arg5: memref<1x10xf32, #tpu.memory_space<vmem>>, %arg6: memref<32x10xf32, #tpu.memory_space<vmem>>) attributes {dimension_semantics = [#tpu.dimension_semantics<parallel>], iteration_bounds = array<i64: 2>, scalar_prefetch = 0 : i64, scratch_operands = 0 : i64, tpu.core_type = #tpu.core_type<tc>, window_params = [{transform_indices = @transform_0, window_bounds = array<i64: 32, 784>}, {pipeline_mode = #tpu.pipeline_mode<synchronous>, transform_indices = @transform_1, window_bounds = array<i64: 784, 128>}, {pipeline_mode = #tpu.pipeline_mode<synchronous>, transform_indices = @transform_2, window_bounds = array<i64: 1, 128>}, {pipeline_mode = #tpu.pipeline_mode<synchronous>, transform_indices = @transform_3, window_bounds = array<i64: 128, 10>}, {pipeline_mode = #tpu.pipeline_mode<synchronous>, transform_indices = @transform_4, window_bounds = array<i64: 1, 10>}, {transform_indices = @transform_5, window_bounds = array<i64: 32, 10>}]} {
    %c0 = arith.constant 0 : index
    %c0_0 = arith.constant 0 : index
    %0 = vector.load %arg1[%c0, %c0_0] : memref<32x784xf32, #tpu.memory_space<vmem>>, vector<32x784xf32>
    %c0_1 = arith.constant 0 : index
    %c0_2 = arith.constant 0 : index
    %1 = vector.load %arg2[%c0_1, %c0_2] : memref<784x128xf32, #tpu.memory_space<vmem>>, vector<784x128xf32>
    %cst = arith.constant dense<0.000000e+00> : vector<32x128xf32>
    %2 = tpu.matmul %0, %1, %cst {dimension_numbers = #tpu.dot_dimension_numbers<[1], [0], [0], [1], [0, 0, 1, 1], [], []>} : vector<32x784xf32>, vector<784x128xf32>, vector<32x128xf32> -> vector<32x128xf32>
    %c0_3 = arith.constant 0 : index
    %c0_4 = arith.constant 0 : index
    %3 = vector.load %arg3[%c0_3, %c0_4] : memref<1x128xf32, #tpu.memory_space<vmem>>, vector<1x128xf32>
    %4 = vector.broadcast %3 : vector<1x128xf32> to vector<32x128xf32>
    %5 = arith.addf %2, %4 : vector<32x128xf32>
    %cst_5 = arith.constant 0.000000e+00 : f32
    %6 = vector.broadcast %cst_5 : f32 to vector<32x128xf32>
    %7 = arith.maximumf %5, %6 : vector<32x128xf32>
    %cst_6 = arith.constant 9.99999974E-6 : f32
    %8 = vector.broadcast %cst_6 : f32 to vector<32x128xf32>
    %9 = arith.addf %5, %8 : vector<32x128xf32>
    %cst_7 = arith.constant 0.000000e+00 : f32
    %cst_8 = arith.constant 9.99999974E-6 : f32
    %10 = vector.broadcast %cst_7 : f32 to vector<32x128xf32>
    %11 = arith.maximumf %10, %9 : vector<32x128xf32>
    %12 = vector.broadcast %cst_8 : f32 to vector<32x128xf32>
    %13 = arith.minimumf %12, %11 : vector<32x128xf32>
    %cst_9 = arith.constant 1.000000e+05 : f32
    %14 = vector.broadcast %cst_9 : f32 to vector<32x128xf32>
    %15 = arith.mulf %13, %14 : vector<32x128xf32>
    %16 = math.sqrt %15 : vector<32x128xf32>
    %17 = arith.addf %7, %16 : vector<32x128xf32>
    %c0_10 = arith.constant 0 : index
    %c0_11 = arith.constant 0 : index
    %18 = vector.load %arg4[%c0_10, %c0_11] : memref<128x10xf32, #tpu.memory_space<vmem>>, vector<128x10xf32>
    %cst_12 = arith.constant dense<0.000000e+00> : vector<32x10xf32>
    %19 = tpu.matmul %17, %18, %cst_12 {dimension_numbers = #tpu.dot_dimension_numbers<[1], [0], [0], [1], [0, 0, 1, 1], [], []>} : vector<32x128xf32>, vector<128x10xf32>, vector<32x10xf32> -> vector<32x10xf32>
    %c0_13 = arith.constant 0 : index
    %c0_14 = arith.constant 0 : index
    %20 = vector.load %arg5[%c0_13, %c0_14] : memref<1x10xf32, #tpu.memory_space<vmem>>, vector<1x10xf32>
    %21 = vector.broadcast %20 : vector<1x10xf32> to vector<32x10xf32>
    %22 = arith.addf %19, %21 : vector<32x10xf32>
    %c0_15 = arith.constant 0 : index
    %c0_16 = arith.constant 0 : index
    %23 = vector.load %arg6[%c0_15, %c0_16] : memref<32x10xf32, #tpu.memory_space<vmem>>, vector<32x10xf32>
    tpu.vector_store %arg6[%c0_15, %c0_16], %22 {strides = array<i32>} : memref<32x10xf32, #tpu.memory_space<vmem>>, vector<32x10xf32>,
    return
  }
  func.func @transform_0(%arg0: i32) -> (i32, i32) {
    %c0_i32 = arith.constant 0 : i32
    %c0_i32_0 = arith.constant 0 : i32
    return %arg0, %c0_i32 : i32, i32
  }
  func.func @transform_1(%arg0: i32) -> (i32, i32) {
    %c0_i32 = arith.constant 0 : i32
    %c0_i32_0 = arith.constant 0 : i32
    %c0_i32_1 = arith.constant 0 : i32
    return %c0_i32, %c0_i32_0 : i32, i32
  }
  func.func @transform_2(%arg0: i32) -> (i32, i32) {
    %c0_i32 = arith.constant 0 : i32
    %c0_i32_0 = arith.constant 0 : i32
    %c0_i32_1 = arith.constant 0 : i32
    return %c0_i32, %c0_i32_0 : i32, i32
  }
  func.func @transform_3(%arg0: i32) -> (i32, i32) {
    %c0_i32 = arith.constant 0 : i32
    %c0_i32_0 = arith.constant 0 : i32
    %c0_i32_1 = arith.constant 0 : i32
    return %c0_i32, %c0_i32_0 : i32, i32
  }
  func.func @transform_4(%arg0: i32) -> (i32, i32) {
    %c0_i32 = arith.constant 0 : i32
    %c0_i32_0 = arith.constant 0 : i32
    %c0_i32_1 = arith.constant 0 : i32
    return %c0_i32, %c0_i32_0 : i32, i32
  }
  func.func @transform_5(%arg0: i32) -> (i32, i32) {
    %c0_i32 = arith.constant 0 : i32
    %c0_i32_0 = arith.constant 0 : i32
    return %arg0, %c0_i32 : i32, i32
  }
}

</mosaic_0001>

<llo_original>
// kernel: simple_network.1
$region0: #{simple_network.1}
  #allocation0 [shape = 'u32[]', space=smem, size = 0x4, offset = 0x4, fixed_abs, tag = 'smem constant byte address 0x4 - core index']
  #allocation1 [shape = 'u32[144,128]{1,0:T(1,128)}', space=vmem, size = 0x12000, scoped, tag = 'internal scratch']
  %s0 = inlined_call_operand.hbm [shape: f32[64,784], index: 0, kind: input, shape index: {}]
  %s1 = inlined_call_operand.hbm [shape: f32[784,128], index: 1, kind: input, shape index: {}]
  %s2 = inlined_call_operand.vmem [shape: f32[1,128], index: 2, kind: input, shape index: {}]
  %s3 = inlined_call_operand.vmem [shape: f32[128,10], index: 3, kind: input, shape index: {}]
  %s4 = inlined_call_operand.vmem [shape: f32[1,10], index: 4, kind: input, shape index: {}]
  %s5 = inlined_call_operand.vmem [shape: f32[64,10], index: 5, kind: output, shape index: {}]
  %s6 = sld [smem:[#allocation0]]
  $region61: #{simple_network.1} parent=0
    _
  %s8 = ssub.s32 1, %s6
  %s9 = scalar_select 0, %s8, %s6
  $region1: #{simple_network.1} parent=0
    #allocation2 [shape = 'u8[229376]{0}', space=vmem, size = 0x38000, scoped, tag = 'input window, operand 0']
    #allocation3 [shape = 's32[2]{0}', space=sflag, size = 0x8, scoped, tag = 'scoped memory for simple_network.1']
    #allocation4 [shape = 'u8[401408]{0}', space=vmem, size = 0x62000, scoped, tag = 'input window, operand 1, single buffered']
    #allocation5 [shape = 's32[1]{0}', space=sflag, size = 0x4, scoped, tag = 'scoped memory for simple_network.1']
    %10 = vsyncpa [#allocation3], 0
    %s11 = scalar_lea.sflag [#allocation3], 1
    %12 = vsyncpa %s11, 0
    %13 = vsyncpa [#allocation5], 0
    loop: start=0, step=1, limit=4
    $region2: #{simple_network.1} parent=1 // loop_pre_header
      _
    $region3: #{simple_network.1} parent=1 // loop_header
      %s15 = sphi 0, %s19
      %p16 = scmp.ge.s32.totalorder %s15, 4
      %s25 = sphi 0, %s27
      %s28 = sphi 0, %s25
      %s29 = sphi 0, %s28
      %s45 = sphi 0, %s29
      %s49 = sphi 0, %s49
      %s51 = sphi 0, %s49
      %s52 = sphi 0, %s51
      %s66 = sphi 0, %s52
      %s70 = sphi 0, %s70
      %s72 = sphi 0, %s70
      %s73 = sphi 0, %s72
      %s87 = sphi 0, %s73
      %s91 = sphi 0, %s91
      %s93 = sphi 0, %s91
      %s94 = sphi 0, %s93
      %s108 = sphi 0, %s94
      %s112 = sphi 0, %s112
      %s114 = sphi 0, %s112
      %s115 = sphi 0, %s114
      %s129 = sphi 0, %s115
      %s135 = sphi 0, %s137
      %s138 = sphi 0, %s135
      %s139 = sphi 0, %s138
      %s155 = sphi 0, %s139
    $region4: #{simple_network.1} parent=1 // loop_header_branch
      %18 = sbr.rel (%p16) target = $region8
    $region5: #{simple_network.1} parent=1 // loop_body
      %s20 = ssub.s32 %s15, 1
      %s21 = ssub.s32 %s15, 2
      %s22 = sadd.s32 %s15, 1
      %s23 = ssub.s32 %s15, %s22
      %p24 = scmp.eq.s32.totalorder %s23, 0
      %s26 = sadd.s32 %s25, 1
      %s27 = scalar_select %p24, %s25, %s26
      %p30 = pneg %p24
      %p31 = scmp.eq.s32.totalorder %s15, 1
      %p32 = por %p30, %p31
      %p33 = scmp.ne.s32.totalorder %s25, %s28
      %p34 = scmp.eq.s32.totalorder %s15, 0
      %p35 = por %p33, %p34
      %p36 = scmp.ne.s32.totalorder %s25, %s28
      %p37 = scmp.eq.s32.totalorder %s20, 1
      %p38 = por %p36, %p37
      %p39 = scmp.ne.s32.totalorder %s28, %s29
      %p40 = scmp.eq.s32.totalorder %s20, 0
      %p41 = por %p39, %p40
      %p42 = scmp.ne.s32.totalorder %s28, %s29
      %p43 = scmp.eq.s32.totalorder %s21, 1
      %p44 = por %p42, %p43
      %p46 = scmp.ne.s32.totalorder %s29, %s45
      %p47 = scmp.eq.s32.totalorder %s21, 0
      %p48 = por %p46, %p47
      %s50 = sadd.s32 %s49, 1
      %p53 = scmp.eq.s32.totalorder %s15, 1
      %p54 = scmp.ne.s32.totalorder %s49, %s51
      %p55 = scmp.eq.s32.totalorder %s15, 0
      %p56 = por %p54, %p55
      %p57 = scmp.ne.s32.totalorder %s49, %s51
      %p58 = scmp.eq.s32.totalorder %s20, 1
      %p59 = por %p57, %p58
      %p60 = scmp.ne.s32.totalorder %s51, %s52
      %p61 = scmp.eq.s32.totalorder %s20, 0
      %p62 = por %p60, %p61
      %p63 = scmp.ne.s32.totalorder %s51, %s52
      %p64 = scmp.eq.s32.totalorder %s21, 1
      %p65 = por %p63, %p64
      %p67 = scmp.ne.s32.totalorder %s52, %s66
      %p68 = scmp.eq.s32.totalorder %s21, 0
      %p69 = por %p67, %p68
      %s71 = sadd.s32 %s70, 1
      %p74 = scmp.eq.s32.totalorder %s15, 1
      %p75 = scmp.ne.s32.totalorder %s70, %s72
      %p76 = scmp.eq.s32.totalorder %s15, 0
      %p77 = por %p75, %p76
      %p78 = scmp.ne.s32.totalorder %s70, %s72
      %p79 = scmp.eq.s32.totalorder %s20, 1
      %p80 = por %p78, %p79
      %p81 = scmp.ne.s32.totalorder %s72, %s73
      %p82 = scmp.eq.s32.totalorder %s20, 0
      %p83 = por %p81, %p82
      %p84 = scmp.ne.s32.totalorder %s72, %s73
      %p85 = scmp.eq.s32.totalorder %s21, 1
      %p86 = por %p84, %p85
      %p88 = scmp.ne.s32.totalorder %s73, %s87
      %p89 = scmp.eq.s32.totalorder %s21, 0
      %p90 = por %p88, %p89
      %s92 = sadd.s32 %s91, 1
      %p95 = scmp.eq.s32.totalorder %s15, 1
      %p96 = scmp.ne.s32.totalorder %s91, %s93
      %p97 = scmp.eq.s32.totalorder %s15, 0
      %p98 = por %p96, %p97
      %p99 = scmp.ne.s32.totalorder %s91, %s93
      %p100 = scmp.eq.s32.totalorder %s20, 1
      %p101 = por %p99, %p100
      %p102 = scmp.ne.s32.totalorder %s93, %s94
      %p103 = scmp.eq.s32.totalorder %s20, 0
      %p104 = por %p102, %p103
      %p105 = scmp.ne.s32.totalorder %s93, %s94
      %p106 = scmp.eq.s32.totalorder %s21, 1
      %p107 = por %p105, %p106
      %p109 = scmp.ne.s32.totalorder %s94, %s108
      %p110 = scmp.eq.s32.totalorder %s21, 0
      %p111 = por %p109, %p110
      %s113 = sadd.s32 %s112, 1
      %p116 = scmp.eq.s32.totalorder %s15, 1
      %p117 = scmp.ne.s32.totalorder %s112, %s114
      %p118 = scmp.eq.s32.totalorder %s15, 0
      %p119 = por %p117, %p118
      %p120 = scmp.ne.s32.totalorder %s112, %s114
      %p121 = scmp.eq.s32.totalorder %s20, 1
      %p122 = por %p120, %p121
      %p123 = scmp.ne.s32.totalorder %s114, %s115
      %p124 = scmp.eq.s32.totalorder %s20, 0
      %p125 = por %p123, %p124
      %p126 = scmp.ne.s32.totalorder %s114, %s115
      %p127 = scmp.eq.s32.totalorder %s21, 1
      %p128 = por %p126, %p127
      %p130 = scmp.ne.s32.totalorder %s115, %s129
      %p131 = scmp.eq.s32.totalorder %s21, 0
      %p132 = por %p130, %p131
      %s133 = ssub.s32 %s15, %s22
      %p134 = scmp.eq.s32.totalorder %s133, 0
      %s136 = sadd.s32 %s135, 1
      %s137 = scalar_select %p134, %s135, %s136
      %p140 = pneg %p134
      %p141 = scmp.eq.s32.totalorder %s15, 1
      %p142 = por %p140, %p141
      %p143 = scmp.ne.s32.totalorder %s135, %s138
      %p144 = scmp.eq.s32.totalorder %s15, 0
      %p145 = por %p143, %p144
      %p146 = scmp.ne.s32.totalorder %s135, %s138
      %p147 = scmp.eq.s32.totalorder %s20, 1
      %p148 = por %p146, %p147
      %p149 = scmp.ne.s32.totalorder %s138, %s139
      %p150 = scmp.eq.s32.totalorder %s20, 0
      %p151 = por %p149, %p150
      %p152 = scmp.ne.s32.totalorder %s138, %s139
      %p153 = scmp.eq.s32.totalorder %s21, 1
      %p154 = por %p152, %p153
      %p156 = scmp.ne.s32.totalorder %s139, %s155
      %p157 = scmp.eq.s32.totalorder %s21, 0
      %p158 = por %p156, %p157
      %p159 = scmp.le.s32.totalorder 1, %s15
      %p160 = scmp.lt.s32.totalorder %s15, 3
      %p161 = pnand %p159, %p160
      %p162 = pneg %p161
      // Predicated region
      $region9: #{simple_network.1} parent=5 // pred_check
        _
      $region10: #{simple_network.1} parent=5 // pred_check_branch
        %164 = sbr.rel (%p161) target = $region12
      $region11: #{simple_network.1} parent=5 // pred_region
        %s165 = ssub.s32 %s15, 1
        // Predicated region
        $region13: #{simple_network.1} parent=11 // pred_check
          %p166 = pneg %p62
        $region14: #{simple_network.1} parent=11 // pred_check_branch
          %168 = sbr.rel (%p166) target = $region16
        $region15: #{simple_network.1} parent=11 // pred_region
          %s170 = ssub.s32 12544, 12544
          %171 = vsyncadd [#allocation5], %s170
          %s172 = sshll.u32 [#allocation4], 4
          %s173 = int_to_ptr.vmem [resolvable:$true] %s172
          %178 = dma.hbm_to_vmem [thread:$0]  %s1, 12544, %s173, [#allocation5], 128, 128, 8
        $region16: #{simple_network.1} parent=11 // pred_fallthru
          _
        // Predicated region
        $region17: #{simple_network.1} parent=11 // pred_check
          %p179 = pneg %p83
        $region18: #{simple_network.1} parent=11 // pred_check_branch
          %181 = sbr.rel (%p179) target = $region20
        $region19: #{simple_network.1} parent=11 // pred_region
          _
        $region20: #{simple_network.1} parent=11 // pred_fallthru
          _
        // Predicated region
        $region21: #{simple_network.1} parent=11 // pred_check
          %p182 = pneg %p104
        $region22: #{simple_network.1} parent=11 // pred_check_branch
          %184 = sbr.rel (%p182) target = $region24
        $region23: #{simple_network.1} parent=11 // pred_region
          _
        $region24: #{simple_network.1} parent=11 // pred_fallthru
          _
        // Predicated region
        $region25: #{simple_network.1} parent=11 // pred_check
          %p185 = pneg %p125
        $region26: #{simple_network.1} parent=11 // pred_check_branch
          %187 = sbr.rel (%p185) target = $region28
        $region27: #{simple_network.1} parent=11 // pred_region
          _
        $region28: #{simple_network.1} parent=11 // pred_fallthru
          _
      $region12: #{simple_network.1} parent=5 // pred_fallthru
        _
      %p188 = scmp.lt.s32.totalorder %s15, 2
      // Predicated region
      $region29: #{simple_network.1} parent=5 // pred_check
        %p189 = pneg %p188
      $region30: #{simple_network.1} parent=5 // pred_check_branch
        %191 = sbr.rel (%p189) target = $region32
      $region31: #{simple_network.1} parent=5 // pred_region
        // Predicated region
        $region33: #{simple_network.1} parent=31 // pred_check
          %p192 = pneg %p35
        $region34: #{simple_network.1} parent=31 // pred_check_branch
          %194 = sbr.rel (%p192) target = $region36
        $region35: #{simple_network.1} parent=31 // pred_region
          %s195 = sand.u32 %s25, 1
          %s196 = scalar_lea.sflag [#allocation3], %s195
          %s197 = sand.u32 %s25, 1
          %s198 = smul.addr %s197, 224
          %s199 = scalar_lea.vmem [#allocation2], %s198
          %s200 = smul.u32 4, %s15
          %s202 = ssub.s32 3584, 3584
          %203 = vsyncadd %s196, %s202
          %s204 = smul.addr %s200, 7
          %s205 = smul.addr %s204, 128
          %s206 = scalar_lea.hbm %s0, %s205
          %s207 = sshll.u32 %s199, 4
          %s208 = int_to_ptr.vmem [resolvable:$true] %s207
          %213 = dma.hbm_to_vmem [thread:$0]  %s206, 3584, %s208, %s196, 896, 896, 56
        $region36: #{simple_network.1} parent=31 // pred_fallthru
          _
      $region32: #{simple_network.1} parent=5 // pred_fallthru
        _
      %p214 = scmp.le.s32.totalorder 1, %s15
      %p215 = scmp.lt.s32.totalorder %s15, 3
      %p216 = pnand %p214, %p215
      %p217 = pneg %p216
      // Predicated region
      $region37: #{simple_network.1} parent=5 // pred_check
        _
      $region38: #{simple_network.1} parent=5 // pred_check_branch
        %219 = sbr.rel (%p216) target = $region40
      $region39: #{simple_network.1} parent=5 // pred_region
        %s220 = ssub.s32 %s15, 1
        %s221 = sand.u32 %s28, 1
        %s222 = scalar_lea.sflag [#allocation3], %s221
        %s223 = sand.u32 %s28, 1
        %s224 = smul.addr %s223, 224
        %s225 = scalar_lea.vmem [#allocation2], %s224
        // Predicated region
        $region41: #{simple_network.1} parent=39 // pred_check
          %p226 = pneg %p41
        $region42: #{simple_network.1} parent=39 // pred_check_branch
          %228 = sbr.rel (%p226) target = $region44
        $region43: #{simple_network.1} parent=39 // pred_region
          %229 = dma.done %s222, 3584
        $region44: #{simple_network.1} parent=39 // pred_fallthru
          _
        // Predicated region
        $region45: #{simple_network.1} parent=39 // pred_check
          %p230 = pneg %p62
        $region46: #{simple_network.1} parent=39 // pred_check_branch
          %232 = sbr.rel (%p230) target = $region48
        $region47: #{simple_network.1} parent=39 // pred_region
          %233 = dma.done [#allocation5], 12544
        $region48: #{simple_network.1} parent=39 // pred_fallthru
          _
        %s234 = sand.u32 %s28, 1
        %s235 = scalar_lea.sflag [#allocation3], %s234
        %s236 = sand.u32 %s28, 1
        %s237 = smul.addr %s236, 224
        %s238 = scalar_lea.vmem [#allocation2], %s237
        %p239 = pneg %p41
        %p240 = pneg %p38
        %p241 = pneg %p62
        %p242 = pneg %p59
        %p243 = pneg %p83
        %p244 = pneg %p80
        %p245 = pneg %p104
        %p246 = pneg %p101
        %p247 = pneg %p125
        %p248 = pneg %p122
        %p249 = pneg %p151
        %p250 = pneg %p148
        %s251 = smul.u32 4, %s20
        %p252 = scmp.lt.s32.totalorder %s251, 7
        %s253 = scalar_select %p252, %s251, 7
        %s254 = smul.addr %s253, 8
        %s255 = scalar_lea.vmem %s5, %s254
        %s256 = smul.u32 4, %s20
        %s257 = smul.u32 4, %s20
        %p258 = scmp.lt.s32.totalorder %s257, 7
        %s259 = scalar_select %p258, %s257, 7
        %s260 = smul.addr %s259, 8
        %s261 = scalar_lea.vmem %s5, %s260
        %s262 = smul.u32 4, %s20
        %v263 = vld [vmem:[%s225] sm:$0xff]
        %v264 = vld [vmem:[%s225 + $0x8] sm:$0xff]
        %v265 = vld [vmem:[%s225 + $0x10] sm:$0xff]
        %v266 = vld [vmem:[%s225 + $0x18] sm:$0xff]
        %v267 = vld [vmem:[%s225 + $0x20] sm:$0xff]
        %v268 = vld [vmem:[%s225 + $0x28] sm:$0xff]
        %v269 = vld [vmem:[%s225 + $0x30] sm:$0xff]
        %v270 = vld [vmem:[%s225 + $0x38] sm:$0xff]
        %v271 = vld [vmem:[%s225 + $0x40] sm:$0xff]
        %v272 = vld [vmem:[%s225 + $0x48] sm:$0xff]
        %v273 = vld [vmem:[%s225 + $0x50] sm:$0xff]
        %v274 = vld [vmem:[%s225 + $0x58] sm:$0xff]
        %v275 = vld [vmem:[%s225 + $0x60] sm:$0xff]
        %v276 = vld [vmem:[%s225 + $0x68] sm:$0xff]
        %v277 = vld [vmem:[%s225 + $0x70] sm:$0xff]
        %v278 = vld [vmem:[%s225 + $0x78] sm:$0xff]
        %v279 = vld [vmem:[%s225 + $0x80] sm:$0xff]
        %v280 = vld [vmem:[%s225 + $0x88] sm:$0xff]
        %v281 = vld [vmem:[%s225 + $0x90] sm:$0xff]
        %v282 = vld [vmem:[%s225 + $0x98] sm:$0xff]
        %v283 = vld [vmem:[%s225 + $0xa0] sm:$0xff]
        %v284 = vld [vmem:[%s225 + $0xa8] sm:$0xff]
        %v285 = vld [vmem:[%s225 + $0xb0] sm:$0xff]
        %v286 = vld [vmem:[%s225 + $0xb8] sm:$0xff]
        %v287 = vld [vmem:[%s225 + $0xc0] sm:$0xff]
        %v288 = vld [vmem:[%s225 + $0xc8] sm:$0xff]
        %v289 = vld [vmem:[%s225 + $0xd0] sm:$0xff]
        %v290 = vld [vmem:[%s225 + $0xd8] sm:$0xff]
        %v291 = vld [vmem:[#allocation4] sm:$0xff]
        %v292 = vld [vmem:[#allocation4 + $0x8] sm:$0xff]
        %v293 = vld [vmem:[#allocation4 + $0x10] sm:$0xff]
        %v294 = vld [vmem:[#allocation4 + $0x18] sm:$0xff]
        %v295 = vld [vmem:[#allocation4 + $0x20] sm:$0xff]
        %v296 = vld [vmem:[#allocation4 + $0x28] sm:$0xff]
        %v297 = vld [vmem:[#allocation4 + $0x30] sm:$0xff]
        %v298 = vld [vmem:[#allocation4 + $0x38] sm:$0xff]
        %v299 = vld [vmem:[#allocation4 + $0x40] sm:$0xff]
        %v300 = vld [vmem:[#allocation4 + $0x48] sm:$0xff]
        %v301 = vld [vmem:[#allocation4 + $0x50] sm:$0xff]
        %v302 = vld [vmem:[#allocation4 + $0x58] sm:$0xff]
        %v303 = vld [vmem:[#allocation4 + $0x60] sm:$0xff]
        %v304 = vld [vmem:[#allocation4 + $0x68] sm:$0xff]
        %v305 = vld [vmem:[#allocation4 + $0x70] sm:$0xff]
        %v306 = vld [vmem:[#allocation4 + $0x78] sm:$0xff]
        %v307 = vld [vmem:[#allocation4 + $0x80] sm:$0xff]
        %v308 = vld [vmem:[#allocation4 + $0x88] sm:$0xff]
        %v309 = vld [vmem:[#allocation4 + $0x90] sm:$0xff]
        %v310 = vld [vmem:[#allocation4 + $0x98] sm:$0xff]
        %v311 = vld [vmem:[#allocation4 + $0xa0] sm:$0xff]
        %v312 = vld [vmem:[#allocation4 + $0xa8] sm:$0xff]
        %v313 = vld [vmem:[#allocation4 + $0xb0] sm:$0xff]
        %v314 = vld [vmem:[#allocation4 + $0xb8] sm:$0xff]
        %v315 = vld [vmem:[#allocation4 + $0xc0] sm:$0xff]
        %v316 = vld [vmem:[#allocation4 + $0xc8] sm:$0xff]
        %v317 = vld [vmem:[#allocation4 + $0xd0] sm:$0xff]
        %v318 = vld [vmem:[#allocation4 + $0xd8] sm:$0xff]
        %v319 = vld [vmem:[#allocation4 + $0xe0] sm:$0xff]
        %v320 = vld [vmem:[#allocation4 + $0xe8] sm:$0xff]
        %v321 = vld [vmem:[#allocation4 + $0xf0] sm:$0xff]
        %v322 = vld [vmem:[#allocation4 + $0xf8] sm:$0xff]
        %v323 = vld [vmem:[#allocation4 + $0x100] sm:$0xff]
        %v324 = vld [vmem:[#allocation4 + $0x108] sm:$0xff]
        %v325 = vld [vmem:[#allocation4 + $0x110] sm:$0xff]
        %v326 = vld [vmem:[#allocation4 + $0x118] sm:$0xff]
        %v327 = vld [vmem:[#allocation4 + $0x120] sm:$0xff]
        %v328 = vld [vmem:[#allocation4 + $0x128] sm:$0xff]
        %v329 = vld [vmem:[#allocation4 + $0x130] sm:$0xff]
        %v330 = vld [vmem:[#allocation4 + $0x138] sm:$0xff]
        %v331 = vld [vmem:[#allocation4 + $0x140] sm:$0xff]
        %v332 = vld [vmem:[#allocation4 + $0x148] sm:$0xff]
        %v333 = vld [vmem:[#allocation4 + $0x150] sm:$0xff]
        %v334 = vld [vmem:[#allocation4 + $0x158] sm:$0xff]
        %v335 = vld [vmem:[#allocation4 + $0x160] sm:$0xff]
        %v336 = vld [vmem:[#allocation4 + $0x168] sm:$0xff]
        %v337 = vld [vmem:[#allocation4 + $0x170] sm:$0xff]
        %v338 = vld [vmem:[#allocation4 + $0x178] sm:$0xff]
        %v339 = vld [vmem:[#allocation4 + $0x180] sm:$0xff]
        %v340 = vld [vmem:[#allocation4 + $0x188] sm:$0xff]
        %v341 = vld [vmem:[#allocation4 + $0x190] sm:$0xff]
        %v342 = vld [vmem:[#allocation4 + $0x198] sm:$0xff]
        %v343 = vld [vmem:[#allocation4 + $0x1a0] sm:$0xff]
        %v344 = vld [vmem:[#allocation4 + $0x1a8] sm:$0xff]
        %v345 = vld [vmem:[#allocation4 + $0x1b0] sm:$0xff]
        %v346 = vld [vmem:[#allocation4 + $0x1b8] sm:$0xff]
        %v347 = vld [vmem:[#allocation4 + $0x1c0] sm:$0xff]
        %v348 = vld [vmem:[#allocation4 + $0x1c8] sm:$0xff]
        %v349 = vld [vmem:[#allocation4 + $0x1d0] sm:$0xff]
        %v350 = vld [vmem:[#allocation4 + $0x1d8] sm:$0xff]
        %v351 = vld [vmem:[#allocation4 + $0x1e0] sm:$0xff]
        %v352 = vld [vmem:[#allocation4 + $0x1e8] sm:$0xff]
        %v353 = vld [vmem:[#allocation4 + $0x1f0] sm:$0xff]
        %v354 = vld [vmem:[#allocation4 + $0x1f8] sm:$0xff]
        %v355 = vld [vmem:[#allocation4 + $0x200] sm:$0xff]
        %v356 = vld [vmem:[#allocation4 + $0x208] sm:$0xff]
        %v357 = vld [vmem:[#allocation4 + $0x210] sm:$0xff]
        %v358 = vld [vmem:[#allocation4 + $0x218] sm:$0xff]
        %v359 = vld [vmem:[#allocation4 + $0x220] sm:$0xff]
        %v360 = vld [vmem:[#allocation4 + $0x228] sm:$0xff]
        %v361 = vld [vmem:[#allocation4 + $0x230] sm:$0xff]
        %v362 = vld [vmem:[#allocation4 + $0x238] sm:$0xff]
        %v363 = vld [vmem:[#allocation4 + $0x240] sm:$0xff]
        %v364 = vld [vmem:[#allocation4 + $0x248] sm:$0xff]
        %v365 = vld [vmem:[#allocation4 + $0x250] sm:$0xff]
        %v366 = vld [vmem:[#allocation4 + $0x258] sm:$0xff]
        %v367 = vld [vmem:[#allocation4 + $0x260] sm:$0xff]
        %v368 = vld [vmem:[#allocation4 + $0x268] sm:$0xff]
        %v369 = vld [vmem:[#allocation4 + $0x270] sm:$0xff]
        %v370 = vld [vmem:[#allocation4 + $0x278] sm:$0xff]
        %v371 = vld [vmem:[#allocation4 + $0x280] sm:$0xff]
        %v372 = vld [vmem:[#allocation4 + $0x288] sm:$0xff]
        %v373 = vld [vmem:[#allocation4 + $0x290] sm:$0xff]
        %v374 = vld [vmem:[#allocation4 + $0x298] sm:$0xff]
        %v375 = vld [vmem:[#allocation4 + $0x2a0] sm:$0xff]
        %v376 = vld [vmem:[#allocation4 + $0x2a8] sm:$0xff]
        %v377 = vld [vmem:[#allocation4 + $0x2b0] sm:$0xff]
        %v378 = vld [vmem:[#allocation4 + $0x2b8] sm:$0xff]
        %v379 = vld [vmem:[#allocation4 + $0x2c0] sm:$0xff]
        %v380 = vld [vmem:[#allocation4 + $0x2c8] sm:$0xff]
        %v381 = vld [vmem:[#allocation4 + $0x2d0] sm:$0xff]
        %v382 = vld [vmem:[#allocation4 + $0x2d8] sm:$0xff]
        %v383 = vld [vmem:[#allocation4 + $0x2e0] sm:$0xff]
        %v384 = vld [vmem:[#allocation4 + $0x2e8] sm:$0xff]
        %v385 = vld [vmem:[#allocation4 + $0x2f0] sm:$0xff]
        %v386 = vld [vmem:[#allocation4 + $0x2f8] sm:$0xff]
        %v387 = vld [vmem:[#allocation4 + $0x300] sm:$0xff]
        %v388 = vld [vmem:[#allocation4 + $0x308] sm:$0xff]
        %v389 = vld [vmem:[%s2] sm:$0x1]
        %v391 = vlaneseq
        %v392 = vshrl.u32 %v391, 7
        %v393 = vsub.s32 0, %v392
        %v394 = vrot.slane %v389, %v393
        %vm396 = vcmask 130048
        %v398 = vsel %vm396, %v269, 0
        %v401 = vsel %vm396, %v276, 0
        %v404 = vsel %vm396, %v283, 0
        %v407 = vsel %vm396, %v290, 0
        %409 = vmatprep.subr.mxu0 0.0
        %410 = vmatpush1.msra.mxu0 %v306
        %411 = vmatprep.subr.mxu0 0.0
        %412 = vmatpush1.msra.mxu0 %v305
        %413 = vmatprep.subr.mxu0 0.0
        %414 = vmatpush1.msra.mxu0 %v304
        %415 = vmatprep.subr.mxu0 0.0
        %416 = vmatpush1.msra.mxu0 %v303
        %417 = vmatprep.subr.mxu0 0.0
        %418 = vmatpush1.msra.mxu0 %v302
        %419 = vmatprep.subr.mxu0 0.0
        %420 = vmatpush1.msra.mxu0 %v301
        %421 = vmatprep.subr.mxu0 0.0
        %422 = vmatpush1.msra.mxu0 %v300
        %423 = vmatprep.subr.mxu0 0.0
        %424 = vmatpush1.msra.mxu0 %v299
        %425 = vmatprep.subr.mxu0 0.0
        %426 = vmatpush1.msra.mxu0 %v298
        %427 = vmatprep.subr.mxu0 0.0
        %428 = vmatpush1.msra.mxu0 %v297
        %429 = vmatprep.subr.mxu0 0.0
        %430 = vmatpush1.msra.mxu0 %v296
        %431 = vmatprep.subr.mxu0 0.0
        %432 = vmatpush1.msra.mxu0 %v295
        %433 = vmatprep.subr.mxu0 0.0
        %434 = vmatpush1.msra.mxu0 %v294
        %435 = vmatprep.subr.mxu0 0.0
        %436 = vmatpush1.msra.mxu0 %v293
        %437 = vmatprep.subr.mxu0 0.0
        %438 = vmatpush1.msra.mxu0 %v292
        %439 = vmatprep.subr.mxu0 0.0
        %440 = vmatpush1.msra.mxu0 %v291
        %441 = vmatprep.subr.mxu0 0.0
        %442 = vmatpush2.msra.mxu0 %v322
        %443 = vmatprep.subr.mxu0 0.0
        %444 = vmatpush2.msra.mxu0 %v321
        %445 = vmatprep.subr.mxu0 0.0
        %446 = vmatpush2.msra.mxu0 %v320
        %447 = vmatprep.subr.mxu0 0.0
        %448 = vmatpush2.msra.mxu0 %v319
        %449 = vmatprep.subr.mxu0 0.0
        %450 = vmatpush2.msra.mxu0 %v318
        %451 = vmatprep.subr.mxu0 0.0
        %452 = vmatpush2.msra.mxu0 %v317
        %453 = vmatprep.subr.mxu0 0.0
        %454 = vmatpush2.msra.mxu0 %v316
        %455 = vmatprep.subr.mxu0 0.0
        %456 = vmatpush2.msra.mxu0 %v315
        %457 = vmatprep.subr.mxu0 0.0
        %458 = vmatpush2.msra.mxu0 %v314
        %459 = vmatprep.subr.mxu0 0.0
        %460 = vmatpush2.msra.mxu0 %v313
        %461 = vmatprep.subr.mxu0 0.0
        %462 = vmatpush2.msra.mxu0 %v312
        %463 = vmatprep.subr.mxu0 0.0
        %464 = vmatpush2.msra.mxu0 %v311
        %465 = vmatprep.subr.mxu0 0.0
        %466 = vmatpush2.msra.mxu0 %v310
        %467 = vmatprep.subr.mxu0 0.0
        %468 = vmatpush2.msra.mxu0 %v309
        %469 = vmatprep.subr.mxu0 0.0
        %470 = vmatpush2.msra.mxu0 %v308
        %471 = vmatprep.subr.mxu0 0.0
        %472 = vmatpush2.msra.mxu0 %v307
        %473 = vmatprep.mubr.f32.mxu0 %v264
        %474 = vmatmul.mubr.f32.gmra.mxu0 %v263
        %v475 = vpop.f32.mrf.mxu0
        %v476 = vadd.f32 %v394, %v475
        %v477 = vpop.f32.mrf.mxu0
        %478 = vmatprep.mubr.f32.mxu0 %v271
        %479 = vmatmul.mubr.f32.gmra.mxu0 %v270
        %v480 = vpop.f32.mrf.mxu0
        %v481 = vadd.f32 %v394, %v480
        %v482 = vpop.f32.mrf.mxu0
        %483 = vmatprep.mubr.f32.mxu0 %v278
        %484 = vmatmul.mubr.f32.gmra.mxu0 %v277
        %v485 = vpop.f32.mrf.mxu0
        %v486 = vadd.f32 %v394, %v485
        %v487 = vpop.f32.mrf.mxu0
        %488 = vmatprep.mubr.f32.mxu0 %v285
        %489 = vmatmul.mubr.f32.gmra.mxu0 %v284
        %v490 = vpop.f32.mrf.mxu0
        %v491 = vadd.f32 %v394, %v490
        %v492 = vpop.f32.mrf.mxu0
        %493 = vdwg.mxu0
        %494 = vmatprep.subr.mxu0 0.0
        %495 = vmatpush1.msra.mxu0 %v338
        %496 = vmatprep.subr.mxu0 0.0
        %497 = vmatpush1.msra.mxu0 %v337
        %498 = vmatprep.subr.mxu0 0.0
        %499 = vmatpush1.msra.mxu0 %v336
        %500 = vmatprep.subr.mxu0 0.0
        %501 = vmatpush1.msra.mxu0 %v335
        %502 = vmatprep.subr.mxu0 0.0
        %503 = vmatpush1.msra.mxu0 %v334
        %504 = vmatprep.subr.mxu0 0.0
        %505 = vmatpush1.msra.mxu0 %v333
        %506 = vmatprep.subr.mxu0 0.0
        %507 = vmatpush1.msra.mxu0 %v332
        %508 = vmatprep.subr.mxu0 0.0
        %509 = vmatpush1.msra.mxu0 %v331
        %510 = vmatprep.subr.mxu0 0.0
        %511 = vmatpush1.msra.mxu0 %v330
        %512 = vmatprep.subr.mxu0 0.0
        %513 = vmatpush1.msra.mxu0 %v329
        %514 = vmatprep.subr.mxu0 0.0
        %515 = vmatpush1.msra.mxu0 %v328
        %516 = vmatprep.subr.mxu0 0.0
        %517 = vmatpush1.msra.mxu0 %v327
        %518 = vmatprep.subr.mxu0 0.0
        %519 = vmatpush1.msra.mxu0 %v326
        %520 = vmatprep.subr.mxu0 0.0
        %521 = vmatpush1.msra.mxu0 %v325
        %522 = vmatprep.subr.mxu0 0.0
        %523 = vmatpush1.msra.mxu0 %v324
        %524 = vmatprep.subr.mxu0 0.0
        %525 = vmatpush1.msra.mxu0 %v323
        %526 = vmatprep.subr.mxu0 0.0
        %527 = vmatpush2.msra.mxu0 %v354
        %528 = vmatprep.subr.mxu0 0.0
        %529 = vmatpush2.msra.mxu0 %v353
        %530 = vmatprep.subr.mxu0 0.0
        %531 = vmatpush2.msra.mxu0 %v352
        %532 = vmatprep.subr.mxu0 0.0
        %533 = vmatpush2.msra.mxu0 %v351
        %534 = vmatprep.subr.mxu0 0.0
        %535 = vmatpush2.msra.mxu0 %v350
        %536 = vmatprep.subr.mxu0 0.0
        %537 = vmatpush2.msra.mxu0 %v349
        %538 = vmatprep.subr.mxu0 0.0
        %539 = vmatpush2.msra.mxu0 %v348
        %540 = vmatprep.subr.mxu0 0.0
        %541 = vmatpush2.msra.mxu0 %v347
        %542 = vmatprep.subr.mxu0 0.0
        %543 = vmatpush2.msra.mxu0 %v346
        %544 = vmatprep.subr.mxu0 0.0
        %545 = vmatpush2.msra.mxu0 %v345
        %546 = vmatprep.subr.mxu0 0.0
        %547 = vmatpush2.msra.mxu0 %v344
        %548 = vmatprep.subr.mxu0 0.0
        %549 = vmatpush2.msra.mxu0 %v343
        %550 = vmatprep.subr.mxu0 0.0
        %551 = vmatpush2.msra.mxu0 %v342
        %552 = vmatprep.subr.mxu0 0.0
        %553 = vmatpush2.msra.mxu0 %v341
        %554 = vmatprep.subr.mxu0 0.0
        %555 = vmatpush2.msra.mxu0 %v340
        %556 = vmatprep.subr.mxu0 0.0
        %557 = vmatpush2.msra.mxu0 %v339
        %558 = vmatprep.mubr.f32.mxu0 %v266
        %559 = vmatmul.mubr.f32.gmra.mxu0 %v265
        %v560 = vpop.f32.mrf.mxu0
        %v561 = vadd.f32 %v476, %v560
        %v562 = vpop.f32.mrf.mxu0
        %563 = vmatprep.mubr.f32.mxu0 %v273
        %564 = vmatmul.mubr.f32.gmra.mxu0 %v272
        %v565 = vpop.f32.mrf.mxu0
        %v566 = vadd.f32 %v481, %v565
        %v567 = vpop.f32.mrf.mxu0
        %568 = vmatprep.mubr.f32.mxu0 %v280
        %569 = vmatmul.mubr.f32.gmra.mxu0 %v279
        %v570 = vpop.f32.mrf.mxu0
        %v571 = vadd.f32 %v486, %v570
        %v572 = vpop.f32.mrf.mxu0
        %573 = vmatprep.mubr.f32.mxu0 %v287
        %574 = vmatmul.mubr.f32.gmra.mxu0 %v286
        %v575 = vpop.f32.mrf.mxu0
        %v576 = vadd.f32 %v491, %v575
        %v577 = vpop.f32.mrf.mxu0
        %578 = vdwg.mxu0
        %579 = vmatprep.subr.mxu0 0.0
        %580 = vmatpush1.msra.mxu0 %v370
        %581 = vmatprep.subr.mxu0 0.0
        %582 = vmatpush1.msra.mxu0 %v369
        %583 = vmatprep.subr.mxu0 0.0
        %584 = vmatpush1.msra.mxu0 %v368
        %585 = vmatprep.subr.mxu0 0.0
        %586 = vmatpush1.msra.mxu0 %v367
        %587 = vmatprep.subr.mxu0 0.0
        %588 = vmatpush1.msra.mxu0 %v366
        %589 = vmatprep.subr.mxu0 0.0
        %590 = vmatpush1.msra.mxu0 %v365
        %591 = vmatprep.subr.mxu0 0.0
        %592 = vmatpush1.msra.mxu0 %v364
        %593 = vmatprep.subr.mxu0 0.0
        %594 = vmatpush1.msra.mxu0 %v363
        %595 = vmatprep.subr.mxu0 0.0
        %596 = vmatpush1.msra.mxu0 %v362
        %597 = vmatprep.subr.mxu0 0.0
        %598 = vmatpush1.msra.mxu0 %v361
        %599 = vmatprep.subr.mxu0 0.0
        %600 = vmatpush1.msra.mxu0 %v360
        %601 = vmatprep.subr.mxu0 0.0
        %602 = vmatpush1.msra.mxu0 %v359
        %603 = vmatprep.subr.mxu0 0.0
        %604 = vmatpush1.msra.mxu0 %v358
        %605 = vmatprep.subr.mxu0 0.0
        %606 = vmatpush1.msra.mxu0 %v357
        %607 = vmatprep.subr.mxu0 0.0
        %608 = vmatpush1.msra.mxu0 %v356
        %609 = vmatprep.subr.mxu0 0.0
        %610 = vmatpush1.msra.mxu0 %v355
        %611 = vmatprep.subr.mxu0 0.0
        %612 = vmatpush2.msra.mxu0 %v386
        %613 = vmatprep.subr.mxu0 0.0
        %614 = vmatpush2.msra.mxu0 %v385
        %615 = vmatprep.subr.mxu0 0.0
        %616 = vmatpush2.msra.mxu0 %v384
        %617 = vmatprep.subr.mxu0 0.0
        %618 = vmatpush2.msra.mxu0 %v383
        %619 = vmatprep.subr.mxu0 0.0
        %620 = vmatpush2.msra.mxu0 %v382
        %621 = vmatprep.subr.mxu0 0.0
        %622 = vmatpush2.msra.mxu0 %v381
        %623 = vmatprep.subr.mxu0 0.0
        %624 = vmatpush2.msra.mxu0 %v380
        %625 = vmatprep.subr.mxu0 0.0
        %626 = vmatpush2.msra.mxu0 %v379
        %627 = vmatprep.subr.mxu0 0.0
        %628 = vmatpush2.msra.mxu0 %v378
        %629 = vmatprep.subr.mxu0 0.0
        %630 = vmatpush2.msra.mxu0 %v377
        %631 = vmatprep.subr.mxu0 0.0
        %632 = vmatpush2.msra.mxu0 %v376
        %633 = vmatprep.subr.mxu0 0.0
        %634 = vmatpush2.msra.mxu0 %v375
        %635 = vmatprep.subr.mxu0 0.0
        %636 = vmatpush2.msra.mxu0 %v374
        %637 = vmatprep.subr.mxu0 0.0
        %638 = vmatpush2.msra.mxu0 %v373
        %639 = vmatprep.subr.mxu0 0.0
        %640 = vmatpush2.msra.mxu0 %v372
        %641 = vmatprep.subr.mxu0 0.0
        %642 = vmatpush2.msra.mxu0 %v371
        %643 = vmatprep.mubr.f32.mxu0 %v268
        %644 = vmatmul.mubr.f32.gmra.mxu0 %v267
        %v645 = vpop.f32.mrf.mxu0
        %v646 = vadd.f32 %v561, %v645
        %v647 = vpop.f32.mrf.mxu0
        %648 = vmatprep.mubr.f32.mxu0 %v275
        %649 = vmatmul.mubr.f32.gmra.mxu0 %v274
        %v650 = vpop.f32.mrf.mxu0
        %v651 = vadd.f32 %v566, %v650
        %v652 = vpop.f32.mrf.mxu0
        %653 = vmatprep.mubr.f32.mxu0 %v282
        %654 = vmatmul.mubr.f32.gmra.mxu0 %v281
        %v655 = vpop.f32.mrf.mxu0
        %v656 = vadd.f32 %v571, %v655
        %v657 = vpop.f32.mrf.mxu0
        %658 = vmatprep.mubr.f32.mxu0 %v289
        %659 = vmatmul.mubr.f32.gmra.mxu0 %v288
        %v660 = vpop.f32.mrf.mxu0
        %v661 = vadd.f32 %v576, %v660
        %v662 = vpop.f32.mrf.mxu0
        %663 = vdwg.mxu0
        %664 = vmatprep.subr.mxu0 0.0
        %665 = vmatpush1.msra.mxu0 0.0
        %666 = vmatprep.subr.mxu0 0.0
        %667 = vmatpush1.msra.mxu0 0.0
        %668 = vmatprep.subr.mxu0 0.0
        %669 = vmatpush1.msra.mxu0 0.0
        %670 = vmatprep.subr.mxu0 0.0
        %671 = vmatpush1.msra.mxu0 0.0
        %672 = vmatprep.subr.mxu0 0.0
        %673 = vmatpush1.msra.mxu0 0.0
        %674 = vmatprep.subr.mxu0 0.0
        %675 = vmatpush1.msra.mxu0 0.0
        %676 = vmatprep.subr.mxu0 0.0
        %677 = vmatpush1.msra.mxu0 0.0
        %678 = vmatprep.subr.mxu0 0.0
        %679 = vmatpush1.msra.mxu0 0.0
        %680 = vmatprep.subr.mxu0 0.0
        %681 = vmatpush1.msra.mxu0 0.0
        %682 = vmatprep.subr.mxu0 0.0
        %683 = vmatpush1.msra.mxu0 0.0
        %684 = vmatprep.subr.mxu0 0.0
        %685 = vmatpush1.msra.mxu0 0.0
        %686 = vmatprep.subr.mxu0 0.0
        %687 = vmatpush1.msra.mxu0 0.0
        %688 = vmatprep.subr.mxu0 0.0
        %689 = vmatpush1.msra.mxu0 0.0
        %690 = vmatprep.subr.mxu0 0.0
        %691 = vmatpush1.msra.mxu0 0.0
        %692 = vmatprep.subr.mxu0 0.0
        %693 = vmatpush1.msra.mxu0 %v388
        %694 = vmatprep.subr.mxu0 0.0
        %695 = vmatpush1.msra.mxu0 %v387
        %696 = vmatprep.subr.mxu0 0.0
        %697 = vmatpush2.msra.mxu0 0.0
        %698 = vmatprep.subr.mxu0 0.0
        %699 = vmatpush2.msra.mxu0 0.0
        %700 = vmatprep.subr.mxu0 0.0
        %701 = vmatpush2.msra.mxu0 0.0
        %702 = vmatprep.subr.mxu0 0.0
        %703 = vmatpush2.msra.mxu0 0.0
        %704 = vmatprep.subr.mxu0 0.0
        %705 = vmatpush2.msra.mxu0 0.0
        %706 = vmatprep.subr.mxu0 0.0
        %707 = vmatpush2.msra.mxu0 0.0
        %708 = vmatprep.subr.mxu0 0.0
        %709 = vmatpush2.msra.mxu0 0.0
        %710 = vmatprep.subr.mxu0 0.0
        %711 = vmatpush2.msra.mxu0 0.0
        %712 = vmatprep.subr.mxu0 0.0
        %713 = vmatpush2.msra.mxu0 0.0
        %714 = vmatprep.subr.mxu0 0.0
        %715 = vmatpush2.msra.mxu0 0.0
        %716 = vmatprep.subr.mxu0 0.0
        %717 = vmatpush2.msra.mxu0 0.0
        %718 = vmatprep.subr.mxu0 0.0
        %719 = vmatpush2.msra.mxu0 0.0
        %720 = vmatprep.subr.mxu0 0.0
        %721 = vmatpush2.msra.mxu0 0.0
        %722 = vmatprep.subr.mxu0 0.0
        %723 = vmatpush2.msra.mxu0 0.0
        %724 = vmatprep.subr.mxu0 0.0
        %725 = vmatpush2.msra.mxu0 0.0
        %726 = vmatprep.subr.mxu0 0.0
        %727 = vmatpush2.msra.mxu0 0.0
        %728 = vmatprep.mubr.f32.mxu0 0.0
        %729 = vmatmul.mubr.f32.gmra.mxu0 %v398
        %v730 = vpop.f32.mrf.mxu0
        %v731 = vadd.f32 %v646, %v730
        %v732 = vpop.f32.mrf.mxu0
        %733 = vmatprep.mubr.f32.mxu0 0.0
        %734 = vmatmul.mubr.f32.gmra.mxu0 %v401
        %v735 = vpop.f32.mrf.mxu0
        %v736 = vadd.f32 %v651, %v735
        %v737 = vpop.f32.mrf.mxu0
        %738 = vmatprep.mubr.f32.mxu0 0.0
        %739 = vmatmul.mubr.f32.gmra.mxu0 %v404
        %v740 = vpop.f32.mrf.mxu0
        %v741 = vadd.f32 %v656, %v740
        %v742 = vpop.f32.mrf.mxu0
        %743 = vmatprep.mubr.f32.mxu0 0.0
        %744 = vmatmul.mubr.f32.gmra.mxu0 %v407
        %v745 = vpop.f32.mrf.mxu0
        %v746 = vadd.f32 %v661, %v745
        %v747 = vpop.f32.mrf.mxu0
        %748 = vdwg.mxu0
        %v749 = vmax.f32 %v731, 0.0
        %v750 = vmax.f32 %v736, 0.0
        %v751 = vmax.f32 %v741, 0.0
        %v752 = vmax.f32 %v746, 0.0
        %v753 = vadd.f32 %v731, 1e-05
        %v754 = vadd.f32 %v736, 1e-05
        %v755 = vadd.f32 %v741, 1e-05
        %v756 = vadd.f32 %v746, 1e-05
        %v757 = vmax.f32 %v753, 0.0
        %v758 = vmax.f32 %v754, 0.0
        %v759 = vmax.f32 %v755, 0.0
        %v760 = vmax.f32 %v756, 0.0
        %v761 = vmin.f32 %v757, 1e-05
        %v762 = vmin.f32 %v758, 1e-05
        %v763 = vmin.f32 %v759, 1e-05
        %v764 = vmin.f32 %v760, 1e-05
        %v765 = vmul.f32 %v761, 100000.0
        %v766 = vmul.f32 %v762, 100000.0
        %v767 = vmul.f32 %v763, 100000.0
        %v768 = vmul.f32 %v764, 100000.0
        %v769 = vrsqrt.pop %v765
        %v770 = vmul.f32 %v765, %v769
        %vm771 = vcmp.eq.f32.partialorder %v765, inf
        %v772 = vsel %vm771, %v765, %v770
        %vm773 = vcmp.eq.f32.partialorder %v765, 0.0
        %v774 = vand.u32 %v765, 2147483648
        %v775 = vsel %vm773, %v774, %v772
        %v776 = vrsqrt.pop %v766
        %v777 = vmul.f32 %v766, %v776
        %vm778 = vcmp.eq.f32.partialorder %v766, inf
        %v779 = vsel %vm778, %v766, %v777
        %vm780 = vcmp.eq.f32.partialorder %v766, 0.0
        %v781 = vand.u32 %v766, 2147483648
        %v782 = vsel %vm780, %v781, %v779
        %v783 = vrsqrt.pop %v767
        %v784 = vmul.f32 %v767, %v783
        %vm785 = vcmp.eq.f32.partialorder %v767, inf
        %v786 = vsel %vm785, %v767, %v784
        %vm787 = vcmp.eq.f32.partialorder %v767, 0.0
        %v788 = vand.u32 %v767, 2147483648
        %v789 = vsel %vm787, %v788, %v786
        %v790 = vrsqrt.pop %v768
        %v791 = vmul.f32 %v768, %v790
        %vm792 = vcmp.eq.f32.partialorder %v768, inf
        %v793 = vsel %vm792, %v768, %v791
        %vm794 = vcmp.eq.f32.partialorder %v768, 0.0
        %v795 = vand.u32 %v768, 2147483648
        %v796 = vsel %vm794, %v795, %v793
        %v797 = vadd.f32 %v749, %v775
        %v798 = vadd.f32 %v750, %v782
        %v799 = vadd.f32 %v751, %v789
        %v800 = vadd.f32 %v752, %v796
        %v801 = vld [vmem:[%s3] sm:$0xff]
        %v802 = vld [vmem:[%s3 + $0x8] sm:$0xff]
        %v803 = vld [vmem:[%s3 + $0x10] sm:$0xff]
        %v804 = vld [vmem:[%s3 + $0x18] sm:$0xff]
        %v805 = vld [vmem:[%s3 + $0x20] sm:$0xff]
        %v806 = vld [vmem:[%s3 + $0x28] sm:$0xff]
        %v807 = vld [vmem:[%s3 + $0x30] sm:$0xff]
        %v808 = vld [vmem:[%s3 + $0x38] sm:$0xff]
        %v809 = vld [vmem:[%s3 + $0x40] sm:$0xff]
        %v810 = vld [vmem:[%s3 + $0x48] sm:$0xff]
        %v811 = vld [vmem:[%s3 + $0x50] sm:$0xff]
        %v812 = vld [vmem:[%s3 + $0x58] sm:$0xff]
        %v813 = vld [vmem:[%s3 + $0x60] sm:$0xff]
        %v814 = vld [vmem:[%s3 + $0x68] sm:$0xff]
        %v815 = vld [vmem:[%s3 + $0x70] sm:$0xff]
        %v816 = vld [vmem:[%s3 + $0x78] sm:$0xff]
        %v817 = vld [vmem:[%s4] sm:$0x1]
        %v819 = vlaneseq
        %v820 = vshrl.u32 %v819, 7
        %v821 = vsub.s32 0, %v820
        %v822 = vrot.slane %v817, %v821
        %824 = vmatprep.subr.mxu0 0.0
        %825 = vmatpush1.msra.mxu0 %v816
        %826 = vmatprep.subr.mxu0 0.0
        %827 = vmatpush1.msra.mxu0 %v815
        %828 = vmatprep.subr.mxu0 0.0
        %829 = vmatpush1.msra.mxu0 %v814
        %830 = vmatprep.subr.mxu0 0.0
        %831 = vmatpush1.msra.mxu0 %v813
        %832 = vmatprep.subr.mxu0 0.0
        %833 = vmatpush1.msra.mxu0 %v812
        %834 = vmatprep.subr.mxu0 0.0
        %835 = vmatpush1.msra.mxu0 %v811
        %836 = vmatprep.subr.mxu0 0.0
        %837 = vmatpush1.msra.mxu0 %v810
        %838 = vmatprep.subr.mxu0 0.0
        %839 = vmatpush1.msra.mxu0 %v809
        %840 = vmatprep.subr.mxu0 0.0
        %841 = vmatpush1.msra.mxu0 %v808
        %842 = vmatprep.subr.mxu0 0.0
        %843 = vmatpush1.msra.mxu0 %v807
        %844 = vmatprep.subr.mxu0 0.0
        %845 = vmatpush1.msra.mxu0 %v806
        %846 = vmatprep.subr.mxu0 0.0
        %847 = vmatpush1.msra.mxu0 %v805
        %848 = vmatprep.subr.mxu0 0.0
        %849 = vmatpush1.msra.mxu0 %v804
        %850 = vmatprep.subr.mxu0 0.0
        %851 = vmatpush1.msra.mxu0 %v803
        %852 = vmatprep.subr.mxu0 0.0
        %853 = vmatpush1.msra.mxu0 %v802
        %854 = vmatprep.subr.mxu0 0.0
        %855 = vmatpush1.msra.mxu0 %v801
        %856 = vmatprep.subr.mxu0 0.0
        %857 = vmatpush2.msra.mxu0 0.0
        %858 = vmatprep.subr.mxu0 0.0
        %859 = vmatpush2.msra.mxu0 0.0
        %860 = vmatprep.subr.mxu0 0.0
        %861 = vmatpush2.msra.mxu0 0.0
        %862 = vmatprep.subr.mxu0 0.0
        %863 = vmatpush2.msra.mxu0 0.0
        %864 = vmatprep.subr.mxu0 0.0
        %865 = vmatpush2.msra.mxu0 0.0
        %866 = vmatprep.subr.mxu0 0.0
        %867 = vmatpush2.msra.mxu0 0.0
        %868 = vmatprep.subr.mxu0 0.0
        %869 = vmatpush2.msra.mxu0 0.0
        %870 = vmatprep.subr.mxu0 0.0
        %871 = vmatpush2.msra.mxu0 0.0
        %872 = vmatprep.subr.mxu0 0.0
        %873 = vmatpush2.msra.mxu0 0.0
        %874 = vmatprep.subr.mxu0 0.0
        %875 = vmatpush2.msra.mxu0 0.0
        %876 = vmatprep.subr.mxu0 0.0
        %877 = vmatpush2.msra.mxu0 0.0
        %878 = vmatprep.subr.mxu0 0.0
        %879 = vmatpush2.msra.mxu0 0.0
        %880 = vmatprep.subr.mxu0 0.0
        %881 = vmatpush2.msra.mxu0 0.0
        %882 = vmatprep.subr.mxu0 0.0
        %883 = vmatpush2.msra.mxu0 0.0
        %884 = vmatprep.subr.mxu0 0.0
        %885 = vmatpush2.msra.mxu0 0.0
        %886 = vmatprep.subr.mxu0 0.0
        %887 = vmatpush2.msra.mxu0 0.0
        %888 = vmatprep.mubr.f32.mxu0 0.0
        %889 = vmatmul.mubr.f32.gmra.mxu0 %v797
        %v890 = vpop.f32.mrf.mxu0
        %v891 = vadd.f32 %v822, %v890
        %v892 = vpop.f32.mrf.mxu0
        %893 = vmatprep.mubr.f32.mxu0 0.0
        %894 = vmatmul.mubr.f32.gmra.mxu0 %v798
        %v895 = vpop.f32.mrf.mxu0
        %v896 = vadd.f32 %v822, %v895
        %v897 = vpop.f32.mrf.mxu0
        %898 = vmatprep.mubr.f32.mxu0 0.0
        %899 = vmatmul.mubr.f32.gmra.mxu0 %v799
        %v900 = vpop.f32.mrf.mxu0
        %v901 = vadd.f32 %v822, %v900
        %v902 = vpop.f32.mrf.mxu0
        %903 = vmatprep.mubr.f32.mxu0 0.0
        %904 = vmatmul.mubr.f32.gmra.mxu0 %v800
        %v905 = vpop.f32.mrf.mxu0
        %v906 = vadd.f32 %v822, %v905
        %v907 = vpop.f32.mrf.mxu0
        %908 = vdwg.mxu0
        %vm909 = vcmask 80896
        %910 = vst.msk [vmem:[%s261] sm:$0xff] %vm909, %v891
        %911 = vst.msk [vmem:[%s261 + $0x8] sm:$0xff] %vm909, %v896
        %912 = vst.msk [vmem:[%s261 + $0x10] sm:$0xff] %vm909, %v901
        %913 = vst.msk [vmem:[%s261 + $0x18] sm:$0xff] %vm909, %v906
        %s914 = smul.u32 4, %s20
        %p915 = scmp.lt.s32.totalorder %s914, 7
        %s916 = scalar_select %p915, %s914, 7
        %s917 = smul.addr %s916, 8
        %s918 = scalar_lea.vmem %s5, %s917
        // Predicated region
        $region49: #{simple_network.1} parent=39 // pred_check
          %p919 = pneg %p148
        $region50: #{simple_network.1} parent=39 // pred_check_branch
          %921 = sbr.rel (%p919) target = $region52
        $region51: #{simple_network.1} parent=39 // pred_region
          %s922 = smul.u32 4, %s20
        $region52: #{simple_network.1} parent=39 // pred_fallthru
          _
      $region40: #{simple_network.1} parent=5 // pred_fallthru
        _
      %p923 = scmp.le.s32.totalorder 2, %s15
      // Predicated region
      $region53: #{simple_network.1} parent=5 // pred_check
        %p924 = pneg %p923
      $region54: #{simple_network.1} parent=5 // pred_check_branch
        %926 = sbr.rel (%p924) target = $region56
      $region55: #{simple_network.1} parent=5 // pred_region
        %s927 = ssub.s32 %s15, 2
        // Predicated region
        $region57: #{simple_network.1} parent=55 // pred_check
          %p928 = pneg %p154
        $region58: #{simple_network.1} parent=55 // pred_check_branch
          %930 = sbr.rel (%p928) target = $region60
        $region59: #{simple_network.1} parent=55 // pred_region
          %s931 = smul.u32 4, %s21
          %p932 = scmp.lt.s32.totalorder %s931, 7
          %s933 = scalar_select %p932, %s931, 7
          %s934 = smul.addr %s933, 8
          %s935 = scalar_lea.vmem %s5, %s934
        $region60: #{simple_network.1} parent=55 // pred_fallthru
          _
      $region56: #{simple_network.1} parent=5 // pred_fallthru
        _
    $region6: #{simple_network.1} parent=1 // loop_footer
      %s19 = sadd.s32 1, %s15
    $region7: #{simple_network.1} parent=1 // loop_footer_branch
      %14 = sbr.rel target = $region3
    $region8: #{simple_network.1} parent=1 // loop_exit
      _
    %936 = vsyncpa [#allocation3], 1
    %s937 = scalar_lea.sflag [#allocation3], 1
    %938 = vsyncpa %s937, 1
    %939 = vsyncpa [#allocation5], 1

</llo_original>
